<compile_context>
chip_gen: v7x
topology: tpu7x:2x2x1
jax: 0.10.0
libtpu: 0.0.40
codegen_flags: <defaults>
</compile_context>

<pallas_src>
import functools

import jax
import jax.numpy as jnp
from jax import lax
from jax.experimental import pallas as pl
from jax.experimental.pallas import tpu as pltpu

# ---------------- configuration (mirrors config dict in the PyTorch module) ---
EMBED_DIM = 32          # embedding_size
LAYERS = 3              # config['attacker_layers']
NEG_SLOPE = 0.2         # config['neg_slope']
H1 = EMBED_DIM // 2     # 16
H2 = EMBED_DIM // 4     # 8
OUT_DIM = 1

BATCH = 64              # real batch size (padded to a 128-lane multiple in the wrapper)
LANES = 128


def _disc_kernel(x_ref, y_ref, p_ref, out_ref, *,
                 neg_slope, inv_batch, valid_b, d, h1, h2):
    """Whole-batch 3-layer MLP + sigmoid + threshold + mean-BCE, batch on lanes.

    x_ref : (B_pad, D+1)  rows [0, valid_b) are the real batch with a trailing 1.0
                          bias-fold column; padded rows are all-zero.
    y_ref : (1, B_pad)    labels in lanes [0, valid_b).
    p_ref : (h1+h2, d+2)  packed params:
                            [0:h1,      0:d+1 ] = [W1 | b1]        (H1, D+1)
                            [h1:h1+h2,  0:h1+1] = [W2 | b2]        (H2, H1+1)
                            [0:h2+1,    d+1   ] = [w3 ; b3] column (H2+1, 1)
    out_ref: (3, B_pad)   row0 = sigmoid output, row1 = prediction, row2 = loss.
    """
    x = x_ref[...]                                   # (B_pad, D+1)
    P = p_ref[...]

    w1 = P[0:h1, 0:d + 1]                            # (H1, D+1) incl. bias column
    w2 = P[h1:h1 + h2, 0:h1 + 1]                     # (H2, H1+1) incl. bias column
    w3 = P[0:h2 + 1, d + 1:d + 2]                    # (H2+1, 1)  incl. b3 at row h2

    # Linear 1 + LeakyReLU (MXU, rhs-transposed contraction over D+1; bias folded).
    # [Dropout skipped -> eval/identity]
    a = lax.dot_general(w1, x, (((1,), (1,)), ((), ())),
                        preferred_element_type=jnp.float32)        # (H1, B_pad)
    a = jnp.where(a > 0, a, neg_slope * a)

    ones_row = jnp.ones((1, a.shape[1]), jnp.float32)

    # Linear 2 + LeakyReLU (MXU); bias folded via appended ones row.
    a = jnp.dot(w2, jnp.concatenate([a, ones_row], axis=0),
                preferred_element_type=jnp.float32)                # (H2, B_pad)
    a = jnp.where(a > 0, a, neg_slope * a)

    # Linear 3 (H2 -> 1) on VPU + sublane reduce (keeps the 1-wide result off the
    # MXU); b3 folded via the appended ones row.
    a = jnp.concatenate([a, ones_row], axis=0)                     # (H2+1, B_pad)
    s = jnp.sum(a * w3, axis=0, keepdims=True)                     # (1, B_pad)

    # sigmoid + thresholded prediction
    p = 1.0 / (1.0 + jnp.exp(-s))                                  # (1, B_pad)
    pred = (p > 0.5).astype(jnp.float32)

    # BCE loss (PyTorch BCELoss clamps log terms at -100), mean over the REAL batch;
    # padded lanes are masked out of the reduction, inv_batch = 1 / B_real.
    y = y_ref[...]                                                 # (1, B_pad)
    valid = (lax.broadcasted_iota(jnp.int32, p.shape, 1) < valid_b).astype(jnp.float32)
    log_p = jnp.maximum(jnp.log(p), -100.0)
    log_1mp = jnp.maximum(jnp.log(1.0 - p), -100.0)
    bce = -(y * log_p + (1.0 - y) * log_1mp) * valid               # (1, B_pad)
    loss = jnp.sum(bce, axis=1, keepdims=True) * inv_batch         # (1, 1)

    # single lane-dense store of the whole (3, B_pad) output slab
    out_ref[...] = jnp.concatenate(
        [p, pred, jnp.broadcast_to(loss, p.shape)], axis=0)


def pack_params(params):
    """Pack (W1,b1,W2,b2,W3,b3) [PyTorch nn.Linear (out,in) layout] into one
    (H1+H2, D+2) slab with biases pre-folded as extra weight columns/rows.
    Call ONCE per parameter update and reuse the slab across forward calls."""
    w1, b1, w2, b2, w3, b3 = params
    h1, d = w1.shape
    h2 = w2.shape[0]
    # slab layout constraints (see _disc_kernel docstring); true for D=32, H1=16, H2=8
    assert d >= h1 >= 1, "packed-slab layout requires embed_dim >= embed_dim//2 >= 1"
    slab = jnp.zeros((h1 + h2, d + 2), jnp.float32)
    slab = slab.at[0:h1, 0:d].set(w1.astype(jnp.float32))
    slab = slab.at[0:h1, d].set(b1.astype(jnp.float32))             # layer-1 bias col
    slab = slab.at[h1:h1 + h2, 0:h1].set(w2.astype(jnp.float32))
    slab = slab.at[h1:h1 + h2, h1].set(b2.astype(jnp.float32))      # layer-2 bias col
    slab = slab.at[0:h2, d + 1].set(w3[0].astype(jnp.float32))      # final projection
    slab = slab.at[h2, d + 1].set(b3[0].astype(jnp.float32))        # layer-3 bias
    return slab


@jax.jit
def binary_discriminator_forward(x, labels, slab):
    """x: (B, D) embeddings, labels: (B,) or (B,1) floats, slab: pack_params(params).
    Returns (output (B,1), prediction (B,1), loss scalar)."""
    B, D = x.shape
    h1, h2 = D // 2, D // 4
    b_pad = ((B + LANES - 1) // LANES) * LANES           # lane-dense batch axis

    # (B_pad, D+1): real rows carry x and a trailing 1.0 bias-fold column; rest zero.
    x_aug = jnp.zeros((b_pad, D + 1), jnp.float32)
    x_aug = x_aug.at[:B, :D].set(x.astype(jnp.float32))
    x_aug = x_aug.at[:B, D].set(1.0)
    y_row = jnp.zeros((1, b_pad), jnp.float32)
    y_row = y_row.at[0, :B].set(labels.reshape(-1).astype(jnp.float32))

    kernel = functools.partial(_disc_kernel, neg_slope=NEG_SLOPE,
                               inv_batch=1.0 / B, valid_b=B, d=D, h1=h1, h2=h2)

    out = pl.pallas_call(                                  # grid-less: single invocation
        kernel,
        out_shape=jax.ShapeDtypeStruct((3, b_pad), jnp.float32),
        in_specs=[
            pl.BlockSpec(memory_space=pltpu.MemorySpace.VMEM),   # x (padded, bias col)
            pl.BlockSpec(memory_space=pltpu.MemorySpace.VMEM),   # labels row
            pl.BlockSpec(memory_space=pltpu.MemorySpace.VMEM),   # packed params
        ],
        out_specs=pl.BlockSpec(memory_space=pltpu.MemorySpace.VMEM),
    )(x_aug, y_row, slab)

    output = out[0, :B][:, None]        # (B, 1) sigmoid probabilities
    prediction = out[1, :B][:, None]    # (B, 1) 0/1 predictions
    loss = out[2, 0]                    # scalar mean BCE
    return output, prediction, loss


def _init_params(key):
    """Deterministic init matching BinaryDiscriminator.init_weights: N(0, 0.01).
    Weights kept in PyTorch nn.Linear (out_features, in_features) layout."""
    ks = jax.random.split(key, 6)
    std = 0.01
    w1 = std * jax.random.normal(ks[0], (H1, EMBED_DIM), jnp.float32)
    b1 = std * jax.random.normal(ks[1], (H1,), jnp.float32)
    w2 = std * jax.random.normal(ks[2], (H2, H1), jnp.float32)
    b2 = std * jax.random.normal(ks[3], (H2,), jnp.float32)
    w3 = std * jax.random.normal(ks[4], (OUT_DIM, H2), jnp.float32)
    b3 = std * jax.random.normal(ks[5], (OUT_DIM,), jnp.float32)
    return (w1, b1, w2, b2, w3, b3)


def _reference(x, labels, params):
    w1, b1, w2, b2, w3, b3 = params
    h = x @ w1.T + b1
    h = jnp.where(h > 0, h, NEG_SLOPE * h)
    h = h @ w2.T + b2
    h = jnp.where(h > 0, h, NEG_SLOPE * h)
    s = h @ w3.T + b3
    p = 1.0 / (1.0 + jnp.exp(-s))
    pred = (p > 0.5).astype(jnp.float32)
    pv = p[:, 0]
    bce = -(labels * jnp.maximum(jnp.log(pv), -100.0)
            + (1.0 - labels) * jnp.maximum(jnp.log(1.0 - pv), -100.0))
    return p, pred, jnp.mean(bce)


if __name__ == "__main__":
    key = jax.random.PRNGKey(0)
    k_param, k_x, k_y = jax.random.split(key, 3)

    params = _init_params(k_param)
    x = jax.random.normal(k_x, (BATCH, EMBED_DIM), jnp.float32)
    labels = jax.random.bernoulli(k_y, 0.5, (BATCH,)).astype(jnp.float32)

    slab = pack_params(params)          # packed once per parameter update, then reused
    out, pred, loss = binary_discriminator_forward(x, labels, slab)
    jax.block_until_ready((out, pred, loss))

    ref_out, ref_pred, ref_loss = _reference(x, labels, params)
    assert jnp.allclose(out, ref_out, atol=1e-5), "output mismatch"
    assert jnp.allclose(pred, ref_pred), "prediction mismatch"
    assert jnp.allclose(loss, ref_loss, atol=1e-5), "loss mismatch"

    print("KERNEL_OK")
</pallas_src>

<mosaic_0001>
module attributes {stable_mosaic.version = 11 : i64} {
  func.func @_disc_kernel(%arg0: memref<128x33xf32, #tpu.memory_space<vmem>>, %arg1: memref<1x128xf32, #tpu.memory_space<vmem>>, %arg2: memref<24x34xf32, #tpu.memory_space<vmem>>, %arg3: memref<3x128xf32, #tpu.memory_space<vmem>>) attributes {dimension_semantics = [], scalar_prefetch = 0 : i64, scratch_operands = 0 : i64, tpu.core_type = #tpu.core_type<tc>} {
    %c0 = arith.constant 0 : index
    %c0_0 = arith.constant 0 : index
    %0 = vector.load %arg0[%c0, %c0_0] : memref<128x33xf32, #tpu.memory_space<vmem>>, vector<128x33xf32>
    %c0_1 = arith.constant 0 : index
    %c0_2 = arith.constant 0 : index
    %1 = vector.load %arg2[%c0_1, %c0_2] : memref<24x34xf32, #tpu.memory_space<vmem>>, vector<24x34xf32>
    %2 = vector.extract_strided_slice %1 {offsets = [0, 0], sizes = [16, 33], strides = [1, 1]} : vector<24x34xf32> to vector<16x33xf32>
    %3 = vector.extract_strided_slice %1 {offsets = [16, 0], sizes = [8, 17], strides = [1, 1]} : vector<24x34xf32> to vector<8x17xf32>
    %4 = vector.extract_strided_slice %1 {offsets = [0, 33], sizes = [9, 1], strides = [1, 1]} : vector<24x34xf32> to vector<9x1xf32>
    %cst = arith.constant dense<0.000000e+00> : vector<16x128xf32>
    %5 = tpu.matmul %2, %0, %cst {dimension_numbers = #tpu.dot_dimension_numbers<[1], [1], [0], [0], [0, 0, 1, 0], [], []>} : vector<16x33xf32>, vector<128x33xf32>, vector<16x128xf32> -> vector<16x128xf32>
    %cst_3 = arith.constant 0.000000e+00 : f32
    %6 = vector.broadcast %cst_3 : f32 to vector<16x128xf32>
    %7 = arith.cmpf ogt, %5, %6 : vector<16x128xf32>
    %cst_4 = arith.constant 2.000000e-01 : f32
    %8 = vector.broadcast %cst_4 : f32 to vector<16x128xf32>
    %9 = arith.mulf %8, %5 : vector<16x128xf32>
    %10 = arith.select %7, %5, %9 : vector<16x128xi1>, vector<16x128xf32>
    %cst_5 = arith.constant 1.000000e+00 : f32
    %11 = vector.broadcast %cst_5 : f32 to vector<1x128xf32>
    %12 = tpu.concatenate %10, %11 in 0 : vector<16x128xf32>, vector<1x128xf32> -> vector<17x128xf32>
    %cst_6 = arith.constant dense<0.000000e+00> : vector<8x128xf32>
    %13 = tpu.matmul %3, %12, %cst_6 {dimension_numbers = #tpu.dot_dimension_numbers<[1], [0], [0], [1], [0, 0, 1, 1], [], []>} : vector<8x17xf32>, vector<17x128xf32>, vector<8x128xf32> -> vector<8x128xf32>
    %cst_7 = arith.constant 0.000000e+00 : f32
    %14 = vector.broadcast %cst_7 : f32 to vector<8x128xf32>
    %15 = arith.cmpf ogt, %13, %14 : vector<8x128xf32>
    %cst_8 = arith.constant 2.000000e-01 : f32
    %16 = vector.broadcast %cst_8 : f32 to vector<8x128xf32>
    %17 = arith.mulf %16, %13 : vector<8x128xf32>
    %18 = arith.select %15, %13, %17 : vector<8x128xi1>, vector<8x128xf32>
    %19 = tpu.concatenate %18, %11 in 0 : vector<8x128xf32>, vector<1x128xf32> -> vector<9x128xf32>
    %20 = vector.broadcast %4 : vector<9x1xf32> to vector<9x128xf32>
    %21 = arith.mulf %19, %20 : vector<9x128xf32>
    %cst_9 = arith.constant dense<0.000000e+00> : vector<128xf32>
    %22 = vector.multi_reduction <add>, %21, %cst_9 [0] : vector<9x128xf32> to vector<128xf32>
    %23 = vector.shape_cast %22 : vector<128xf32> to vector<1x128xf32>
    %cst_10 = arith.constant 0.000000e+00 : f32
    %24 = vector.broadcast %cst_10 : f32 to vector<1x128xf32>
    %25 = arith.subf %24, %23 : vector<1x128xf32>
    %26 = math.exp %25 : vector<1x128xf32>
    %cst_11 = arith.constant 1.000000e+00 : f32
    %27 = vector.broadcast %cst_11 : f32 to vector<1x128xf32>
    %28 = arith.addf %27, %26 : vector<1x128xf32>
    %cst_12 = arith.constant 1.000000e+00 : f32
    %29 = vector.broadcast %cst_12 : f32 to vector<1x128xf32>
    %30 = arith.divf %29, %28 : vector<1x128xf32>
    %cst_13 = arith.constant 5.000000e-01 : f32
    %31 = vector.broadcast %cst_13 : f32 to vector<1x128xf32>
    %32 = arith.cmpf ogt, %30, %31 : vector<1x128xf32>
    %33 = arith.extui %32 : vector<1x128xi1> to vector<1x128xi32>
    %34 = arith.sitofp %33 : vector<1x128xi32> to vector<1x128xf32>
    %c0_14 = arith.constant 0 : index
    %c0_15 = arith.constant 0 : index
    %35 = vector.load %arg1[%c0_14, %c0_15] : memref<1x128xf32, #tpu.memory_space<vmem>>, vector<1x128xf32>
    %36 = tpu.iota {dimensions = array<i32: 1>} : vector<1x128xi32>
    %c64_i32 = arith.constant 64 : i32
    %37 = vector.broadcast %c64_i32 : i32 to vector<1x128xi32>
    %38 = arith.cmpi slt, %36, %37 : vector<1x128xi32>
    %39 = arith.extui %38 : vector<1x128xi1> to vector<1x128xi32>
    %40 = arith.sitofp %39 : vector<1x128xi32> to vector<1x128xf32>
    %41 = math.log %30 : vector<1x128xf32>
    %cst_16 = arith.constant -1.000000e+02 : f32
    %42 = vector.broadcast %cst_16 : f32 to vector<1x128xf32>
    %43 = arith.maximumf %41, %42 : vector<1x128xf32>
    %cst_17 = arith.constant 1.000000e+00 : f32
    %44 = vector.broadcast %cst_17 : f32 to vector<1x128xf32>
    %45 = arith.subf %44, %30 : vector<1x128xf32>
    %46 = math.log %45 : vector<1x128xf32>
    %cst_18 = arith.constant -1.000000e+02 : f32
    %47 = vector.broadcast %cst_18 : f32 to vector<1x128xf32>
    %48 = arith.maximumf %46, %47 : vector<1x128xf32>
    %49 = arith.mulf %35, %43 : vector<1x128xf32>
    %cst_19 = arith.constant 1.000000e+00 : f32
    %50 = vector.broadcast %cst_19 : f32 to vector<1x128xf32>
    %51 = arith.subf %50, %35 : vector<1x128xf32>
    %52 = arith.mulf %51, %48 : vector<1x128xf32>
    %53 = arith.addf %49, %52 : vector<1x128xf32>
    %cst_20 = arith.constant 0.000000e+00 : f32
    %54 = vector.broadcast %cst_20 : f32 to vector<1x128xf32>
    %55 = arith.subf %54, %53 : vector<1x128xf32>
    %56 = arith.mulf %55, %40 : vector<1x128xf32>
    %cst_21 = arith.constant dense<0.000000e+00> : vector<1xf32>
    %57 = vector.multi_reduction <add>, %56, %cst_21 [1] : vector<1x128xf32> to vector<1xf32>
    %58 = vector.shape_cast %57 : vector<1xf32> to vector<1x1xf32>
    %cst_22 = arith.constant 1.562500e-02 : f32
    %59 = vector.broadcast %cst_22 : f32 to vector<1x1xf32>
    %60 = arith.mulf %58, %59 : vector<1x1xf32>
    %61 = vector.shape_cast %60 : vector<1x1xf32> to vector<1x1xf32>
    %62 = vector.broadcast %61 : vector<1x1xf32> to vector<1x128xf32>
    %63 = tpu.concatenate %30, %34, %62 in 0 : vector<1x128xf32>, vector<1x128xf32>, vector<1x128xf32> -> vector<3x128xf32>
    %c0_23 = arith.constant 0 : index
    %c0_24 = arith.constant 0 : index
    %64 = vector.load %arg3[%c0_23, %c0_24] : memref<3x128xf32, #tpu.memory_space<vmem>>, vector<3x128xf32>
    tpu.vector_store %arg3[%c0_23, %c0_24], %63 {strides = array<i32>} : memref<3x128xf32, #tpu.memory_space<vmem>>, vector<3x128xf32>,
    return
  }
}

</mosaic_0001>

<llo_original>
// kernel: binary_discriminator_forward.1
$region0: #{binary_discriminator_forward.1}
  #allocation0 [shape = 'u32[]', space=smem, size = 0x4, offset = 0x4, fixed_abs, tag = 'smem constant byte address 0x4 - core index']
  #allocation1 [shape = 'u32[144,128]{1,0:T(1,128)}', space=vmem, size = 0x12000, scoped, tag = 'internal scratch']
  %s0 = inlined_call_operand.vmem [shape: f32[128,33], index: 0, kind: input, shape index: {}]
  %s1 = inlined_call_operand.vmem [shape: f32[1,128], index: 1, kind: input, shape index: {}]
  %s2 = inlined_call_operand.vmem [shape: f32[24,34], index: 2, kind: input, shape index: {}]
  %s3 = inlined_call_operand.vmem [shape: f32[3,128], index: 3, kind: output, shape index: {}]
  %s4 = sld [smem:[#allocation0]]
  $region22: #{binary_discriminator_forward.1} parent=0
    _
  %s6 = ssub.s32 1, %s4
  %s7 = scalar_select 0, %s6, %s4
  // Predicated region
  $region2: #{binary_discriminator_forward.1} parent=0 // pred_check
    _
  $region3: #{binary_discriminator_forward.1} parent=0 // pred_check_branch
    %9 = sbr.rel (0) target = $region5
  $region4: #{binary_discriminator_forward.1} parent=0 // pred_region
    _
  $region5: #{binary_discriminator_forward.1} parent=0 // pred_fallthru
    _
  // Predicated region
  $region6: #{binary_discriminator_forward.1} parent=0 // pred_check
    _
  $region7: #{binary_discriminator_forward.1} parent=0 // pred_check_branch
    %11 = sbr.rel (0) target = $region9
  $region8: #{binary_discriminator_forward.1} parent=0 // pred_region
    _
  $region9: #{binary_discriminator_forward.1} parent=0 // pred_fallthru
    _
  // Predicated region
  $region10: #{binary_discriminator_forward.1} parent=0 // pred_check
    _
  $region11: #{binary_discriminator_forward.1} parent=0 // pred_check_branch
    %13 = sbr.rel (0) target = $region13
  $region12: #{binary_discriminator_forward.1} parent=0 // pred_region
    _
  $region13: #{binary_discriminator_forward.1} parent=0 // pred_fallthru
    _
  %v14 = vld [vmem:[%s0] sm:$0xff]
  %v15 = vld [vmem:[%s0 + $0x8] sm:$0xff]
  %v16 = vld [vmem:[%s0 + $0x10] sm:$0xff]
  %v17 = vld [vmem:[%s0 + $0x18] sm:$0xff]
  %v18 = vld [vmem:[%s0 + $0x20] sm:$0xff]
  %v19 = vld [vmem:[%s0 + $0x28] sm:$0xff]
  %v20 = vld [vmem:[%s0 + $0x30] sm:$0xff]
  %v21 = vld [vmem:[%s0 + $0x38] sm:$0xff]
  %v22 = vld [vmem:[%s0 + $0x40] sm:$0xff]
  %v23 = vld [vmem:[%s0 + $0x48] sm:$0xff]
  %v24 = vld [vmem:[%s0 + $0x50] sm:$0xff]
  %v25 = vld [vmem:[%s0 + $0x58] sm:$0xff]
  %v26 = vld [vmem:[%s0 + $0x60] sm:$0xff]
  %v27 = vld [vmem:[%s0 + $0x68] sm:$0xff]
  %v28 = vld [vmem:[%s0 + $0x70] sm:$0xff]
  %v29 = vld [vmem:[%s0 + $0x78] sm:$0xff]
  %v30 = vld [vmem:[%s2] sm:$0xff]
  %v31 = vld [vmem:[%s2 + $0x8] sm:$0xff]
  %v32 = vld [vmem:[%s2 + $0x10] sm:$0xff]
  %vm33 = vcmask 269312
  %v35 = vsel %vm33, %v30, 0
  %v38 = vsel %vm33, %v31, 0
  %v41 = vsel %vm33, %v14, 0
  %v44 = vsel %vm33, %v15, 0
  %v47 = vsel %vm33, %v16, 0
  %v50 = vsel %vm33, %v17, 0
  %v53 = vsel %vm33, %v18, 0
  %v56 = vsel %vm33, %v19, 0
  %v59 = vsel %vm33, %v20, 0
  %v62 = vsel %vm33, %v21, 0
  %v65 = vsel %vm33, %v22, 0
  %v68 = vsel %vm33, %v23, 0
  %v71 = vsel %vm33, %v24, 0
  %v74 = vsel %vm33, %v25, 0
  %v77 = vsel %vm33, %v26, 0
  %v80 = vsel %vm33, %v27, 0
  %v83 = vsel %vm33, %v28, 0
  %v86 = vsel %vm33, %v29, 0
  %88 = vmatprep.subr.mxu0 0.0
  %89 = vmatpush1.xpose.msra.mxu0 %v41
  %90 = vmatprep.subr.mxu0 0.0
  %91 = vmatpush1.xpose.msra.mxu0 %v44
  %92 = vmatprep.subr.mxu0 0.0
  %93 = vmatpush1.xpose.msra.mxu0 %v47
  %94 = vmatprep.subr.mxu0 0.0
  %95 = vmatpush1.xpose.msra.mxu0 %v50
  %96 = vmatprep.subr.mxu0 0.0
  %97 = vmatpush1.xpose.msra.mxu0 %v53
  %98 = vmatprep.subr.mxu0 0.0
  %99 = vmatpush1.xpose.msra.mxu0 %v56
  %100 = vmatprep.subr.mxu0 0.0
  %101 = vmatpush1.xpose.msra.mxu0 %v59
  %102 = vmatprep.subr.mxu0 0.0
  %103 = vmatpush1.xpose.msra.mxu0 %v62
  %104 = vmatprep.subr.mxu0 0.0
  %105 = vmatpush1.xpose.msra.mxu0 %v65
  %106 = vmatprep.subr.mxu0 0.0
  %107 = vmatpush1.xpose.msra.mxu0 %v68
  %108 = vmatprep.subr.mxu0 0.0
  %109 = vmatpush1.xpose.msra.mxu0 %v71
  %110 = vmatprep.subr.mxu0 0.0
  %111 = vmatpush1.xpose.msra.mxu0 %v74
  %112 = vmatprep.subr.mxu0 0.0
  %113 = vmatpush1.xpose.msra.mxu0 %v77
  %114 = vmatprep.subr.mxu0 0.0
  %115 = vmatpush1.xpose.msra.mxu0 %v80
  %116 = vmatprep.subr.mxu0 0.0
  %117 = vmatpush1.xpose.msra.mxu0 %v83
  %118 = vmatprep.subr.mxu0 0.0
  %119 = vmatpush1.xpose.msra.mxu0 %v86
  %120 = vmatprep.subr.mxu0 0.0
  %121 = vmatpush1.xpose.msra.mxu0 0.0
  %122 = vmatprep.subr.mxu0 0.0
  %123 = vmatpush1.xpose.msra.mxu0 0.0
  %124 = vmatprep.subr.mxu0 0.0
  %125 = vmatpush1.xpose.msra.mxu0 0.0
  %126 = vmatprep.subr.mxu0 0.0
  %127 = vmatpush1.xpose.msra.mxu0 0.0
  %128 = vmatprep.subr.mxu0 0.0
  %129 = vmatpush1.xpose.msra.mxu0 0.0
  %130 = vmatprep.subr.mxu0 0.0
  %131 = vmatpush1.xpose.msra.mxu0 0.0
  %132 = vmatprep.subr.mxu0 0.0
  %133 = vmatpush1.xpose.msra.mxu0 0.0
  %134 = vmatprep.subr.mxu0 0.0
  %135 = vmatpush1.xpose.msra.mxu0 0.0
  %136 = vmatprep.subr.mxu0 0.0
  %137 = vmatpush1.xpose.msra.mxu0 0.0
  %138 = vmatprep.subr.mxu0 0.0
  %139 = vmatpush1.xpose.msra.mxu0 0.0
  %140 = vmatprep.subr.mxu0 0.0
  %141 = vmatpush1.xpose.msra.mxu0 0.0
  %142 = vmatprep.subr.mxu0 0.0
  %143 = vmatpush1.xpose.msra.mxu0 0.0
  %144 = vmatprep.subr.mxu0 0.0
  %145 = vmatpush1.xpose.msra.mxu0 0.0
  %146 = vmatprep.subr.mxu0 0.0
  %147 = vmatpush1.xpose.msra.mxu0 0.0
  %148 = vmatprep.subr.mxu0 0.0
  %149 = vmatpush1.xpose.msra.mxu0 0.0
  %150 = vmatprep.subr.mxu0 0.0
  %151 = vmatpush1.xpose.msra.mxu0 0.0
  %152 = vmatprep.mubr.f32.mxu0 0.0
  %153 = vmatmul.mubr.f32.gmra.mrb[0].mxu0 %v35
  %v154 = vpop.f32.mrb[0].mxu0
  %v155 = vadd.f32 0.0, %v154
  %v156 = vpop.f32.mrb[0].mxu0
  %157 = vmatprep.mubr.f32.mxu0 0.0
  %158 = vmatmul.mubr.f32.gmra.mrb[0].mxu0 %v38
  %v159 = vpop.f32.mrb[0].mxu0
  %v160 = vadd.f32 0.0, %v159
  %v161 = vpop.f32.mrb[0].mxu0
  %162 = vdwg.mxu0
  %vm163 = vcmp.gt.f32.partialorder %v155, 0.0
  %vm164 = vcmp.gt.f32.partialorder %v160, 0.0
  %v165 = vmul.f32 %v155, 0.2
  %v166 = vmul.f32 %v160, 0.2
  %v167 = vsel %vm163, %v155, %v165
  %v168 = vsel %vm164, %v160, %v166
  %vm169 = vcmask 138240
  %v171 = vsel %vm169, %v32, 0
  %vm173 = vcmask 1040384
  %v175 = vsel %vm173, 1.0, 0
  %177 = vmatprep.subr.mxu0 0.0
  %178 = vmatpush1.msra.mxu0 %v167
  %179 = vmatprep.subr.mxu0 0.0
  %180 = vmatpush1.msra.mxu0 %v168
  %181 = vmatprep.subr.mxu0 0.0
  %182 = vmatpush1.msra.mxu0 %v175
  %183 = vmatprep.subr.mxu0 0.0
  %184 = vmatpush1.msra.mxu0 0.0
  %185 = vmatprep.subr.mxu0 0.0
  %186 = vmatpush1.msra.mxu0 0.0
  %187 = vmatprep.subr.mxu0 0.0
  %188 = vmatpush1.msra.mxu0 0.0
  %189 = vmatprep.subr.mxu0 0.0
  %190 = vmatpush1.msra.mxu0 0.0
  %191 = vmatprep.subr.mxu0 0.0
  %192 = vmatpush1.msra.mxu0 0.0
  %193 = vmatprep.subr.mxu0 0.0
  %194 = vmatpush1.msra.mxu0 0.0
  %195 = vmatprep.subr.mxu0 0.0
  %196 = vmatpush1.msra.mxu0 0.0
  %197 = vmatprep.subr.mxu0 0.0
  %198 = vmatpush1.msra.mxu0 0.0
  %199 = vmatprep.subr.mxu0 0.0
  %200 = vmatpush1.msra.mxu0 0.0
  %201 = vmatprep.subr.mxu0 0.0
  %202 = vmatpush1.msra.mxu0 0.0
  %203 = vmatprep.subr.mxu0 0.0
  %204 = vmatpush1.msra.mxu0 0.0
  %205 = vmatprep.subr.mxu0 0.0
  %206 = vmatpush1.msra.mxu0 0.0
  %207 = vmatprep.subr.mxu0 0.0
  %208 = vmatpush1.msra.mxu0 0.0
  %209 = vmatprep.subr.mxu0 0.0
  %210 = vmatpush1.msra.mxu0 0.0
  %211 = vmatprep.subr.mxu0 0.0
  %212 = vmatpush1.msra.mxu0 0.0
  %213 = vmatprep.subr.mxu0 0.0
  %214 = vmatpush1.msra.mxu0 0.0
  %215 = vmatprep.subr.mxu0 0.0
  %216 = vmatpush1.msra.mxu0 0.0
  %217 = vmatprep.subr.mxu0 0.0
  %218 = vmatpush1.msra.mxu0 0.0
  %219 = vmatprep.subr.mxu0 0.0
  %220 = vmatpush1.msra.mxu0 0.0
  %221 = vmatprep.subr.mxu0 0.0
  %222 = vmatpush1.msra.mxu0 0.0
  %223 = vmatprep.subr.mxu0 0.0
  %224 = vmatpush1.msra.mxu0 0.0
  %225 = vmatprep.subr.mxu0 0.0
  %226 = vmatpush1.msra.mxu0 0.0
  %227 = vmatprep.subr.mxu0 0.0
  %228 = vmatpush1.msra.mxu0 0.0
  %229 = vmatprep.subr.mxu0 0.0
  %230 = vmatpush1.msra.mxu0 0.0
  %231 = vmatprep.subr.mxu0 0.0
  %232 = vmatpush1.msra.mxu0 0.0
  %233 = vmatprep.subr.mxu0 0.0
  %234 = vmatpush1.msra.mxu0 0.0
  %235 = vmatprep.subr.mxu0 0.0
  %236 = vmatpush1.msra.mxu0 0.0
  %237 = vmatprep.subr.mxu0 0.0
  %238 = vmatpush1.msra.mxu0 0.0
  %239 = vmatprep.subr.mxu0 0.0
  %240 = vmatpush1.msra.mxu0 0.0
  %241 = vmatprep.mubr.f32.mxu0 0.0
  %242 = vmatmul.mubr.f32.gmra.mrb[0].mxu0 %v171
  %v243 = vpop.f32.mrb[0].mxu0
  %v244 = vadd.f32 0.0, %v243
  %v245 = vpop.f32.mrb[0].mxu0
  %246 = vdwg.mxu0
  %vm247 = vcmp.gt.f32.partialorder %v244, 0.0
  %v248 = vmul.f32 %v244, 0.2
  %v249 = vsel %vm247, %v244, %v248
  %250 = vset.pattern.permute.xlu0 33
  %251 = vperm.xlu0 %250, %v30
  %v252 = vpop.permute.xlu0 %251
  %254 = vset.pattern.permute.xlu0 33
  %255 = vperm.xlu0 %254, %v31
  %v256 = vpop.permute.xlu0 %255
  %v258 = vmul.f32 %v249, %v252
  %v259 = vsel %vm173, %v256, 0.0
  %v260 = vadd.f32 %v258, %v259
  %v261 = vrot.slane %v260, 4
  %v262 = vadd.f32 %v260, %v261
  %v263 = vrot.slane %v262, 2
  %v264 = vadd.f32 %v262, %v263
  %v265 = vrot.slane %v264, 1
  %v266 = vadd.f32 %v264, %v265
  %v267 = vsub.f32 0.0, %v266
  %v268 = vmul.f32 %v267, 1.442695
  %v269 = vpow.pop %v268
  %v270 = vadd.f32 %v269, 1.0
  %v271 = vrcp.pop %v270
  %v272 = vmul.f32 1.0, %v271
  %vm273 = vcmp.gt.f32.partialorder %v272, 0.5
  %v274 = vsel %vm273, 1, 0
  %v275 = vcvt.s32.f32 %v274
  %v276 = vld [vmem:[%s1] sm:$0x1]
  %v277 = vlaneseq
  %v278 = vand.u32 %v277, 127
  %vm279 = vcmp.lt.s32.totalorder %v278, 64
  %v280 = vsel %vm279, 1, 0
  %v281 = vcvt.s32.f32 %v280
  %v282 = vlog2.pop %v272
  %v283 = vmul.f32 %v282, 0.6931472
  %v284 = vmax.f32 %v283, -100.0
  %v285 = vsub.f32 1.0, %v272
  %v286 = vlog2.pop %v285
  %v287 = vmul.f32 %v286, 0.6931472
  %v288 = vmax.f32 %v287, -100.0
  %v289 = vmul.f32 %v276, %v284
  %v290 = vsub.f32 1.0, %v276
  %v291 = vmul.f32 %v290, %v288
  %v292 = vadd.f32 %v289, %v291
  %v293 = vsub.f32 0.0, %v292
  %v294 = vmul.f32 %v293, %v281
  %v295 = vsel %vm173, %v294, 0.0
  %296 = vadd.xlane.f32.xlu0 %v295
  %v297 = vpop.xlane.xlu0 %296
  %v298 = vmul.f32 %v297, 0.015625
  %v300 = vrot.slane %v298, 6
  %v302 = vsel %vm173, %v272, %v275
  %vm303 = vcmask 1041408
  %v304 = vsel %vm303, %v302, %v300
  %305 = vst [vmem:[%s3] sm:$0x7] %v304
  // Predicated region
  $region14: #{binary_discriminator_forward.1} parent=0 // pred_check
    _
  $region15: #{binary_discriminator_forward.1} parent=0 // pred_check_branch
    %307 = sbr.rel (0) target = $region17
  $region16: #{binary_discriminator_forward.1} parent=0 // pred_region
    _
  $region17: #{binary_discriminator_forward.1} parent=0 // pred_fallthru
    _
  // Predicated region
  $region18: #{binary_discriminator_forward.1} parent=0 // pred_check
    _
  $region19: #{binary_discriminator_forward.1} parent=0 // pred_check_branch
    %309 = sbr.rel (0) target = $region21
  $region20: #{binary_discriminator_forward.1} parent=0 // pred_region
    _
  $region21: #{binary_discriminator_forward.1} parent=0 // pred_fallthru
    _

</llo_original>
